<compile_context>
chip_gen: v5e
topology: v5e:2x2
jax: 0.10.0
libtpu: 0.0.40
codegen_flags: <defaults>
</compile_context>

<pallas_src>
import math
import jax
import jax.numpy as jnp
from jax.experimental import pallas as pl
from jax.experimental.pallas import tpu as pltpu


def _round_up(x, m):
    return ((x + m - 1) // m) * m


def _score_kernel(devp_ref, issp_ref, w2_ref, b2_ref, o_ref):
    """One (dev-tile, issue-tile) block of the score matrix.

    devp_ref : (n_inp, TD)  f32 VMEM   W1_dev @ dev_h^T          (dev on lanes)
    issp_ref : (TI, n_inp)  f32 VMEM   issue_h @ W1_iss^T + b1
    w2_ref   : (n_inp,)     f32 SMEM   fc2 weight row (read as scalars)
    b2_ref   : (1,)         f32 SMEM   fc2 bias scalar
    o_ref    : (TI, TD)     f32 VMEM   scores (lane-dense)
    """
    n_inp, td = devp_ref.shape
    ti = issp_ref.shape[0]

    # Whole dev block loaded once; (n_inp, TD) = 32x512 f32 -> 16 vregs, stays
    # resident across the row-group loop below.
    dev = devp_ref[...]
    b2 = b2_ref[0]
    # Hoist the SMEM scalar reads out of the row-group loop.
    w2_vals = [w2_ref[k] for k in range(n_inp)]

    ROWS = 8  # one f32 sublane group per issue sub-tile -> acc is 4 vregs @ TD=512

    @pl.loop(0, ti // ROWS)
    def _(r):
        i0 = pl.multiple_of(r * ROWS, ROWS)
        iss = issp_ref[pl.ds(i0, ROWS), :]            # (8, n_inp)  -- 1 vreg
        acc = jnp.zeros((ROWS, td), jnp.float32)      # (8, TD)
        # Fully-unrolled k accumulation: pure 2-D VPU work, no rank-3
        # intermediate, no VMEM round-trip, no XLU reduction.
        for k in range(n_inp):
            h = jnp.maximum(iss[:, k:k + 1] + dev[k:k + 1, :], 0.0)   # (8, TD)
            acc = acc + h * w2_vals[k]
        o_ref[pl.ds(i0, ROWS), :] = (acc + b2).astype(o_ref.dtype)


def link_predictor_forward(dev_feat, issue_feat, w1, b1, w2, b2,
                           *, tile_issue=None, tile_dev=None):
    """dev_feat: (n_dev, n_inp), issue_feat: (n_issue, n_inp).
    w1: (n_inp, 2*n_inp), b1: (n_inp,)          (PyTorch fc1 layout)
    w2: (n_classes, n_inp), b2: (n_classes,)    (n_classes must be 1)
    Returns scores of shape (n_issue, n_dev)."""
    n_dev, n_inp = dev_feat.shape
    n_issue, _ = issue_feat.shape
    n_classes = w2.shape[0]
    assert n_classes == 1, "view(n_issue, n_dev) requires n_classes == 1"

    # Separable fc1: project each side once (O((n_dev+n_issue)*n_inp^2) work).
    # These matmuls are tiny; HIGHEST is kept so the f32 reference check stays
    # tight -- relax to default precision if bit-exactness is not needed.
    hi = jax.lax.Precision.HIGHEST
    w1_dev = w1[:, :n_inp]                                          # (n_inp, n_inp)
    w1_iss = w1[:, n_inp:]                                          # (n_inp, n_inp)
    dev_projT = jnp.dot(w1_dev, dev_feat.T, precision=hi)           # (n_inp, n_dev)
    issue_proj = jnp.dot(issue_feat, w1_iss.T, precision=hi) + b1   # (n_issue, n_inp)

    # Tile selection: lane-dense dev tiles (multiple of 128); issue tiles a
    # multiple of 8 (f32 sublane group).  Footprint is tiny now that the
    # rank-3 intermediate is gone, so defaults fit every generation's VMEM.
    if tile_dev is None:
        tile_dev = min(512, _round_up(n_dev, 128))
    if tile_issue is None:
        tile_issue = min(512, _round_up(n_issue, 8))
    # v7x has two TensorCores: make sure at least one parallel grid axis has
    # >= 2 blocks when the problem allows it.
    if (_round_up(n_dev, tile_dev) // tile_dev == 1
            and _round_up(n_issue, tile_issue) // tile_issue == 1
            and tile_issue >= 16):
        tile_issue = _round_up(tile_issue // 2, 8)

    n_dev_pad = _round_up(n_dev, tile_dev)
    n_issue_pad = _round_up(n_issue, tile_issue)
    if n_dev_pad != n_dev:
        dev_projT = jnp.pad(dev_projT, ((0, 0), (0, n_dev_pad - n_dev)))
    if n_issue_pad != n_issue:
        issue_proj = jnp.pad(issue_proj, ((0, n_issue_pad - n_issue), (0, 0)))

    w2_row = w2.reshape(n_inp).astype(jnp.float32)    # SMEM scalars
    b2_s = b2.reshape(1).astype(jnp.float32)          # SMEM scalar

    # Dev axis OUTER, issue axis INNER: the dev block (index map -> (0, d))
    # is unchanged across inner steps, so Pallas fetches it once per dev tile.
    grid = (n_dev_pad // tile_dev, n_issue_pad // tile_issue)

    scores_pad = pl.pallas_call(
        _score_kernel,
        out_shape=jax.ShapeDtypeStruct((n_issue_pad, n_dev_pad), jnp.float32),
        grid_spec=pltpu.PrefetchScalarGridSpec(
            num_scalar_prefetch=0,
            grid=grid,
            in_specs=[
                pl.BlockSpec((n_inp, tile_dev), lambda d, i: (0, d)),    # dev projection
                pl.BlockSpec((tile_issue, n_inp), lambda d, i: (i, 0)),  # issue projection (+b1)
                pl.BlockSpec(memory_space=pltpu.MemorySpace.SMEM),       # w2 scalars
                pl.BlockSpec(memory_space=pltpu.MemorySpace.SMEM),       # b2 scalar
            ],
            out_specs=pl.BlockSpec((tile_issue, tile_dev), lambda d, i: (i, d)),
        ),
        compiler_params=pltpu.CompilerParams(
            dimension_semantics=("parallel", "parallel")),
    )(dev_projT.astype(jnp.float32), issue_proj.astype(jnp.float32), w2_row, b2_s)

    # Un-pad only if padding was applied (padded scores are finite garbage).
    if n_dev_pad != n_dev or n_issue_pad != n_issue:
        scores_pad = scores_pad[:n_issue, :n_dev]
    return scores_pad


def _torch_linear_init(key, out_features, in_features):
    """Deterministic init matching nn.Linear defaults (kaiming uniform)."""
    kw, kb = jax.random.split(key)
    bound = 1.0 / math.sqrt(in_features)
    w = jax.random.uniform(kw, (out_features, in_features), jnp.float32, -bound, bound)
    b = jax.random.uniform(kb, (out_features,), jnp.float32, -bound, bound)
    return w, b


if __name__ == "__main__":
    # TODO(synk): DGL graph plumbing (local_scope / apply_edges) has no Pallas
    # equivalent; a complete bipartite developer->issue graph is assumed.
    n_inp = 32
    n_classes = 1
    n_dev = 16
    n_issue = 8

    key = jax.random.PRNGKey(0)
    k_dev, k_issue, k_fc1, k_fc2 = jax.random.split(key, 4)

    dev_feat = jax.random.normal(k_dev, (n_dev, n_inp), jnp.float32)
    issue_feat = jax.random.normal(k_issue, (n_issue, n_inp), jnp.float32)

    w1, b1 = _torch_linear_init(k_fc1, n_inp, 2 * n_inp)   # fc1: Linear(2*n_inp, n_inp)
    w2, b2 = _torch_linear_init(k_fc2, n_classes, n_inp)   # fc2: Linear(n_inp, n_classes)

    scores = link_predictor_forward(dev_feat, issue_feat, w1, b1, w2, b2)
    scores = jax.block_until_ready(scores)

    # Pure-JAX reference (original concat formulation, exact f32 matmuls).
    hi = jax.lax.Precision.HIGHEST
    x_ref = jnp.concatenate(
        [jnp.tile(dev_feat, (n_issue, 1)), jnp.repeat(issue_feat, n_dev, axis=0)], axis=1)
    h_ref = jnp.maximum(jnp.dot(x_ref, w1.T, precision=hi) + b1, 0.0)
    ref = (jnp.dot(h_ref, w2.T, precision=hi) + b2).reshape(n_issue, n_dev)

    assert scores.shape == (n_issue, n_dev)
    assert jnp.allclose(scores, ref, atol=1e-4, rtol=1e-4)

    print("KERNEL_OK")
</pallas_src>

<mosaic_0001>
module attributes {stable_mosaic.version = 11 : i64} {
  func.func @_score_kernel(%arg0: i32, %arg1: i32, %arg2: memref<32x128xf32, #tpu.memory_space<vmem>>, %arg3: memref<8x32xf32, #tpu.memory_space<vmem>>, %arg4: memref<32xf32, #tpu.memory_space<smem>>, %arg5: memref<1xf32, #tpu.memory_space<smem>>, %arg6: memref<8x128xf32, #tpu.memory_space<vmem>>) attributes {dimension_semantics = [#tpu.dimension_semantics<parallel>, #tpu.dimension_semantics<parallel>], iteration_bounds = array<i64: 1, 1>, scalar_prefetch = 0 : i64, scratch_operands = 0 : i64, tpu.core_type = #tpu.core_type<tc>, window_params = [{transform_indices = @transform_0, window_bounds = array<i64: 32, 128>}, {transform_indices = @transform_1, window_bounds = array<i64: 8, 32>}, {transform_indices = @transform_2, window_bounds = array<i64: 32>}, {transform_indices = @transform_3, window_bounds = array<i64: 1>}, {transform_indices = @transform_4, window_bounds = array<i64: 8, 128>}]} {
    %c0 = arith.constant 0 : index
    %c0_0 = arith.constant 0 : index
    %0 = vector.load %arg2[%c0, %c0_0] : memref<32x128xf32, #tpu.memory_space<vmem>>, vector<32x128xf32>
    %c0_1 = arith.constant 0 : index
    %1 = memref.load %arg5[%c0_1] : memref<1xf32, #tpu.memory_space<smem>>
    %c0_2 = arith.constant 0 : index
    %2 = memref.load %arg4[%c0_2] : memref<32xf32, #tpu.memory_space<smem>>
    %c1 = arith.constant 1 : index
    %3 = memref.load %arg4[%c1] : memref<32xf32, #tpu.memory_space<smem>>
    %c2 = arith.constant 2 : index
    %4 = memref.load %arg4[%c2] : memref<32xf32, #tpu.memory_space<smem>>
    %c3 = arith.constant 3 : index
    %5 = memref.load %arg4[%c3] : memref<32xf32, #tpu.memory_space<smem>>
    %c4 = arith.constant 4 : index
    %6 = memref.load %arg4[%c4] : memref<32xf32, #tpu.memory_space<smem>>
    %c5 = arith.constant 5 : index
    %7 = memref.load %arg4[%c5] : memref<32xf32, #tpu.memory_space<smem>>
    %c6 = arith.constant 6 : index
    %8 = memref.load %arg4[%c6] : memref<32xf32, #tpu.memory_space<smem>>
    %c7 = arith.constant 7 : index
    %9 = memref.load %arg4[%c7] : memref<32xf32, #tpu.memory_space<smem>>
    %c8 = arith.constant 8 : index
    %10 = memref.load %arg4[%c8] : memref<32xf32, #tpu.memory_space<smem>>
    %c9 = arith.constant 9 : index
    %11 = memref.load %arg4[%c9] : memref<32xf32, #tpu.memory_space<smem>>
    %c10 = arith.constant 10 : index
    %12 = memref.load %arg4[%c10] : memref<32xf32, #tpu.memory_space<smem>>
    %c11 = arith.constant 11 : index
    %13 = memref.load %arg4[%c11] : memref<32xf32, #tpu.memory_space<smem>>
    %c12 = arith.constant 12 : index
    %14 = memref.load %arg4[%c12] : memref<32xf32, #tpu.memory_space<smem>>
    %c13 = arith.constant 13 : index
    %15 = memref.load %arg4[%c13] : memref<32xf32, #tpu.memory_space<smem>>
    %c14 = arith.constant 14 : index
    %16 = memref.load %arg4[%c14] : memref<32xf32, #tpu.memory_space<smem>>
    %c15 = arith.constant 15 : index
    %17 = memref.load %arg4[%c15] : memref<32xf32, #tpu.memory_space<smem>>
    %c16 = arith.constant 16 : index
    %18 = memref.load %arg4[%c16] : memref<32xf32, #tpu.memory_space<smem>>
    %c17 = arith.constant 17 : index
    %19 = memref.load %arg4[%c17] : memref<32xf32, #tpu.memory_space<smem>>
    %c18 = arith.constant 18 : index
    %20 = memref.load %arg4[%c18] : memref<32xf32, #tpu.memory_space<smem>>
    %c19 = arith.constant 19 : index
    %21 = memref.load %arg4[%c19] : memref<32xf32, #tpu.memory_space<smem>>
    %c20 = arith.constant 20 : index
    %22 = memref.load %arg4[%c20] : memref<32xf32, #tpu.memory_space<smem>>
    %c21 = arith.constant 21 : index
    %23 = memref.load %arg4[%c21] : memref<32xf32, #tpu.memory_space<smem>>
    %c22 = arith.constant 22 : index
    %24 = memref.load %arg4[%c22] : memref<32xf32, #tpu.memory_space<smem>>
    %c23 = arith.constant 23 : index
    %25 = memref.load %arg4[%c23] : memref<32xf32, #tpu.memory_space<smem>>
    %c24 = arith.constant 24 : index
    %26 = memref.load %arg4[%c24] : memref<32xf32, #tpu.memory_space<smem>>
    %c25 = arith.constant 25 : index
    %27 = memref.load %arg4[%c25] : memref<32xf32, #tpu.memory_space<smem>>
    %c26 = arith.constant 26 : index
    %28 = memref.load %arg4[%c26] : memref<32xf32, #tpu.memory_space<smem>>
    %c27 = arith.constant 27 : index
    %29 = memref.load %arg4[%c27] : memref<32xf32, #tpu.memory_space<smem>>
    %c28 = arith.constant 28 : index
    %30 = memref.load %arg4[%c28] : memref<32xf32, #tpu.memory_space<smem>>
    %c29 = arith.constant 29 : index
    %31 = memref.load %arg4[%c29] : memref<32xf32, #tpu.memory_space<smem>>
    %c30 = arith.constant 30 : index
    %32 = memref.load %arg4[%c30] : memref<32xf32, #tpu.memory_space<smem>>
    %c31 = arith.constant 31 : index
    %33 = memref.load %arg4[%c31] : memref<32xf32, #tpu.memory_space<smem>>
    %c0_i32 = arith.constant 0 : i32
    %c1_i32 = arith.constant 1 : i32
    %34 = arith.muli %c0_i32, %c1_i32 : i32
    %c0_i32_3 = arith.constant 0 : i32
    %35 = arith.addi %c0_i32_3, %34 : i32
    %c8_i32 = arith.constant 8 : i32
    %36 = arith.muli %35, %c8_i32 : i32
    %37 = tpu.assume_multiple %36, 8 : i32
    %38 = arith.index_cast %37 : i32 to index
    %c0_4 = arith.constant 0 : index
    %39 = vector.load %arg3[%38, %c0_4] : memref<8x32xf32, #tpu.memory_space<vmem>>, vector<8x32xf32>
    %cst = arith.constant 0.000000e+00 : f32
    %40 = vector.broadcast %cst : f32 to vector<8x128xf32>
    %41 = vector.extract_strided_slice %39 {offsets = [0, 0], sizes = [8, 1], strides = [1, 1]} : vector<8x32xf32> to vector<8x1xf32>
    %42 = vector.extract_strided_slice %0 {offsets = [0, 0], sizes = [1, 128], strides = [1, 1]} : vector<32x128xf32> to vector<1x128xf32>
    %43 = vector.broadcast %41 : vector<8x1xf32> to vector<8x128xf32>
    %44 = vector.broadcast %42 : vector<1x128xf32> to vector<8x128xf32>
    %45 = arith.addf %43, %44 : vector<8x128xf32>
    %cst_5 = arith.constant 0.000000e+00 : f32
    %46 = vector.broadcast %cst_5 : f32 to vector<8x128xf32>
    %47 = arith.maximumf %45, %46 : vector<8x128xf32>
    %48 = vector.broadcast %2 : f32 to vector<8x128xf32>
    %49 = arith.mulf %47, %48 : vector<8x128xf32>
    %50 = arith.addf %40, %49 : vector<8x128xf32>
    %51 = vector.extract_strided_slice %39 {offsets = [0, 1], sizes = [8, 1], strides = [1, 1]} : vector<8x32xf32> to vector<8x1xf32>
    %52 = vector.extract_strided_slice %0 {offsets = [1, 0], sizes = [1, 128], strides = [1, 1]} : vector<32x128xf32> to vector<1x128xf32>
    %53 = vector.broadcast %51 : vector<8x1xf32> to vector<8x128xf32>
    %54 = vector.broadcast %52 : vector<1x128xf32> to vector<8x128xf32>
    %55 = arith.addf %53, %54 : vector<8x128xf32>
    %cst_6 = arith.constant 0.000000e+00 : f32
    %56 = vector.broadcast %cst_6 : f32 to vector<8x128xf32>
    %57 = arith.maximumf %55, %56 : vector<8x128xf32>
    %58 = vector.broadcast %3 : f32 to vector<8x128xf32>
    %59 = arith.mulf %57, %58 : vector<8x128xf32>
    %60 = arith.addf %50, %59 : vector<8x128xf32>
    %61 = vector.extract_strided_slice %39 {offsets = [0, 2], sizes = [8, 1], strides = [1, 1]} : vector<8x32xf32> to vector<8x1xf32>
    %62 = vector.extract_strided_slice %0 {offsets = [2, 0], sizes = [1, 128], strides = [1, 1]} : vector<32x128xf32> to vector<1x128xf32>
    %63 = vector.broadcast %61 : vector<8x1xf32> to vector<8x128xf32>
    %64 = vector.broadcast %62 : vector<1x128xf32> to vector<8x128xf32>
    %65 = arith.addf %63, %64 : vector<8x128xf32>
    %cst_7 = arith.constant 0.000000e+00 : f32
    %66 = vector.broadcast %cst_7 : f32 to vector<8x128xf32>
    %67 = arith.maximumf %65, %66 : vector<8x128xf32>
    %68 = vector.broadcast %4 : f32 to vector<8x128xf32>
    %69 = arith.mulf %67, %68 : vector<8x128xf32>
    %70 = arith.addf %60, %69 : vector<8x128xf32>
    %71 = vector.extract_strided_slice %39 {offsets = [0, 3], sizes = [8, 1], strides = [1, 1]} : vector<8x32xf32> to vector<8x1xf32>
    %72 = vector.extract_strided_slice %0 {offsets = [3, 0], sizes = [1, 128], strides = [1, 1]} : vector<32x128xf32> to vector<1x128xf32>
    %73 = vector.broadcast %71 : vector<8x1xf32> to vector<8x128xf32>
    %74 = vector.broadcast %72 : vector<1x128xf32> to vector<8x128xf32>
    %75 = arith.addf %73, %74 : vector<8x128xf32>
    %cst_8 = arith.constant 0.000000e+00 : f32
    %76 = vector.broadcast %cst_8 : f32 to vector<8x128xf32>
    %77 = arith.maximumf %75, %76 : vector<8x128xf32>
    %78 = vector.broadcast %5 : f32 to vector<8x128xf32>
    %79 = arith.mulf %77, %78 : vector<8x128xf32>
    %80 = arith.addf %70, %79 : vector<8x128xf32>
    %81 = vector.extract_strided_slice %39 {offsets = [0, 4], sizes = [8, 1], strides = [1, 1]} : vector<8x32xf32> to vector<8x1xf32>
    %82 = vector.extract_strided_slice %0 {offsets = [4, 0], sizes = [1, 128], strides = [1, 1]} : vector<32x128xf32> to vector<1x128xf32>
    %83 = vector.broadcast %81 : vector<8x1xf32> to vector<8x128xf32>
    %84 = vector.broadcast %82 : vector<1x128xf32> to vector<8x128xf32>
    %85 = arith.addf %83, %84 : vector<8x128xf32>
    %cst_9 = arith.constant 0.000000e+00 : f32
    %86 = vector.broadcast %cst_9 : f32 to vector<8x128xf32>
    %87 = arith.maximumf %85, %86 : vector<8x128xf32>
    %88 = vector.broadcast %6 : f32 to vector<8x128xf32>
    %89 = arith.mulf %87, %88 : vector<8x128xf32>
    %90 = arith.addf %80, %89 : vector<8x128xf32>
    %91 = vector.extract_strided_slice %39 {offsets = [0, 5], sizes = [8, 1], strides = [1, 1]} : vector<8x32xf32> to vector<8x1xf32>
    %92 = vector.extract_strided_slice %0 {offsets = [5, 0], sizes = [1, 128], strides = [1, 1]} : vector<32x128xf32> to vector<1x128xf32>
    %93 = vector.broadcast %91 : vector<8x1xf32> to vector<8x128xf32>
    %94 = vector.broadcast %92 : vector<1x128xf32> to vector<8x128xf32>
    %95 = arith.addf %93, %94 : vector<8x128xf32>
    %cst_10 = arith.constant 0.000000e+00 : f32
    %96 = vector.broadcast %cst_10 : f32 to vector<8x128xf32>
    %97 = arith.maximumf %95, %96 : vector<8x128xf32>
    %98 = vector.broadcast %7 : f32 to vector<8x128xf32>
    %99 = arith.mulf %97, %98 : vector<8x128xf32>
    %100 = arith.addf %90, %99 : vector<8x128xf32>
    %101 = vector.extract_strided_slice %39 {offsets = [0, 6], sizes = [8, 1], strides = [1, 1]} : vector<8x32xf32> to vector<8x1xf32>
    %102 = vector.extract_strided_slice %0 {offsets = [6, 0], sizes = [1, 128], strides = [1, 1]} : vector<32x128xf32> to vector<1x128xf32>
    %103 = vector.broadcast %101 : vector<8x1xf32> to vector<8x128xf32>
    %104 = vector.broadcast %102 : vector<1x128xf32> to vector<8x128xf32>
    %105 = arith.addf %103, %104 : vector<8x128xf32>
    %cst_11 = arith.constant 0.000000e+00 : f32
    %106 = vector.broadcast %cst_11 : f32 to vector<8x128xf32>
    %107 = arith.maximumf %105, %106 : vector<8x128xf32>
    %108 = vector.broadcast %8 : f32 to vector<8x128xf32>
    %109 = arith.mulf %107, %108 : vector<8x128xf32>
    %110 = arith.addf %100, %109 : vector<8x128xf32>
    %111 = vector.extract_strided_slice %39 {offsets = [0, 7], sizes = [8, 1], strides = [1, 1]} : vector<8x32xf32> to vector<8x1xf32>
    %112 = vector.extract_strided_slice %0 {offsets = [7, 0], sizes = [1, 128], strides = [1, 1]} : vector<32x128xf32> to vector<1x128xf32>
    %113 = vector.broadcast %111 : vector<8x1xf32> to vector<8x128xf32>
    %114 = vector.broadcast %112 : vector<1x128xf32> to vector<8x128xf32>
    %115 = arith.addf %113, %114 : vector<8x128xf32>
    %cst_12 = arith.constant 0.000000e+00 : f32
    %116 = vector.broadcast %cst_12 : f32 to vector<8x128xf32>
    %117 = arith.maximumf %115, %116 : vector<8x128xf32>
    %118 = vector.broadcast %9 : f32 to vector<8x128xf32>
    %119 = arith.mulf %117, %118 : vector<8x128xf32>
    %120 = arith.addf %110, %119 : vector<8x128xf32>
    %121 = vector.extract_strided_slice %39 {offsets = [0, 8], sizes = [8, 1], strides = [1, 1]} : vector<8x32xf32> to vector<8x1xf32>
    %122 = vector.extract_strided_slice %0 {offsets = [8, 0], sizes = [1, 128], strides = [1, 1]} : vector<32x128xf32> to vector<1x128xf32>
    %123 = vector.broadcast %121 : vector<8x1xf32> to vector<8x128xf32>
    %124 = vector.broadcast %122 : vector<1x128xf32> to vector<8x128xf32>
    %125 = arith.addf %123, %124 : vector<8x128xf32>
    %cst_13 = arith.constant 0.000000e+00 : f32
    %126 = vector.broadcast %cst_13 : f32 to vector<8x128xf32>
    %127 = arith.maximumf %125, %126 : vector<8x128xf32>
    %128 = vector.broadcast %10 : f32 to vector<8x128xf32>
    %129 = arith.mulf %127, %128 : vector<8x128xf32>
    %130 = arith.addf %120, %129 : vector<8x128xf32>
    %131 = vector.extract_strided_slice %39 {offsets = [0, 9], sizes = [8, 1], strides = [1, 1]} : vector<8x32xf32> to vector<8x1xf32>
    %132 = vector.extract_strided_slice %0 {offsets = [9, 0], sizes = [1, 128], strides = [1, 1]} : vector<32x128xf32> to vector<1x128xf32>
    %133 = vector.broadcast %131 : vector<8x1xf32> to vector<8x128xf32>
    %134 = vector.broadcast %132 : vector<1x128xf32> to vector<8x128xf32>
    %135 = arith.addf %133, %134 : vector<8x128xf32>
    %cst_14 = arith.constant 0.000000e+00 : f32
    %136 = vector.broadcast %cst_14 : f32 to vector<8x128xf32>
    %137 = arith.maximumf %135, %136 : vector<8x128xf32>
    %138 = vector.broadcast %11 : f32 to vector<8x128xf32>
    %139 = arith.mulf %137, %138 : vector<8x128xf32>
    %140 = arith.addf %130, %139 : vector<8x128xf32>
    %141 = vector.extract_strided_slice %39 {offsets = [0, 10], sizes = [8, 1], strides = [1, 1]} : vector<8x32xf32> to vector<8x1xf32>
    %142 = vector.extract_strided_slice %0 {offsets = [10, 0], sizes = [1, 128], strides = [1, 1]} : vector<32x128xf32> to vector<1x128xf32>
    %143 = vector.broadcast %141 : vector<8x1xf32> to vector<8x128xf32>
    %144 = vector.broadcast %142 : vector<1x128xf32> to vector<8x128xf32>
    %145 = arith.addf %143, %144 : vector<8x128xf32>
    %cst_15 = arith.constant 0.000000e+00 : f32
    %146 = vector.broadcast %cst_15 : f32 to vector<8x128xf32>
    %147 = arith.maximumf %145, %146 : vector<8x128xf32>
    %148 = vector.broadcast %12 : f32 to vector<8x128xf32>
    %149 = arith.mulf %147, %148 : vector<8x128xf32>
    %150 = arith.addf %140, %149 : vector<8x128xf32>
    %151 = vector.extract_strided_slice %39 {offsets = [0, 11], sizes = [8, 1], strides = [1, 1]} : vector<8x32xf32> to vector<8x1xf32>
    %152 = vector.extract_strided_slice %0 {offsets = [11, 0], sizes = [1, 128], strides = [1, 1]} : vector<32x128xf32> to vector<1x128xf32>
    %153 = vector.broadcast %151 : vector<8x1xf32> to vector<8x128xf32>
    %154 = vector.broadcast %152 : vector<1x128xf32> to vector<8x128xf32>
    %155 = arith.addf %153, %154 : vector<8x128xf32>
    %cst_16 = arith.constant 0.000000e+00 : f32
    %156 = vector.broadcast %cst_16 : f32 to vector<8x128xf32>
    %157 = arith.maximumf %155, %156 : vector<8x128xf32>
    %158 = vector.broadcast %13 : f32 to vector<8x128xf32>
    %159 = arith.mulf %157, %158 : vector<8x128xf32>
    %160 = arith.addf %150, %159 : vector<8x128xf32>
    %161 = vector.extract_strided_slice %39 {offsets = [0, 12], sizes = [8, 1], strides = [1, 1]} : vector<8x32xf32> to vector<8x1xf32>
    %162 = vector.extract_strided_slice %0 {offsets = [12, 0], sizes = [1, 128], strides = [1, 1]} : vector<32x128xf32> to vector<1x128xf32>
    %163 = vector.broadcast %161 : vector<8x1xf32> to vector<8x128xf32>
    %164 = vector.broadcast %162 : vector<1x128xf32> to vector<8x128xf32>
    %165 = arith.addf %163, %164 : vector<8x128xf32>
    %cst_17 = arith.constant 0.000000e+00 : f32
    %166 = vector.broadcast %cst_17 : f32 to vector<8x128xf32>
    %167 = arith.maximumf %165, %166 : vector<8x128xf32>
    %168 = vector.broadcast %14 : f32 to vector<8x128xf32>
    %169 = arith.mulf %167, %168 : vector<8x128xf32>
    %170 = arith.addf %160, %169 : vector<8x128xf32>
    %171 = vector.extract_strided_slice %39 {offsets = [0, 13], sizes = [8, 1], strides = [1, 1]} : vector<8x32xf32> to vector<8x1xf32>
    %172 = vector.extract_strided_slice %0 {offsets = [13, 0], sizes = [1, 128], strides = [1, 1]} : vector<32x128xf32> to vector<1x128xf32>
    %173 = vector.broadcast %171 : vector<8x1xf32> to vector<8x128xf32>
    %174 = vector.broadcast %172 : vector<1x128xf32> to vector<8x128xf32>
    %175 = arith.addf %173, %174 : vector<8x128xf32>
    %cst_18 = arith.constant 0.000000e+00 : f32
    %176 = vector.broadcast %cst_18 : f32 to vector<8x128xf32>
    %177 = arith.maximumf %175, %176 : vector<8x128xf32>
    %178 = vector.broadcast %15 : f32 to vector<8x128xf32>
    %179 = arith.mulf %177, %178 : vector<8x128xf32>
    %180 = arith.addf %170, %179 : vector<8x128xf32>
    %181 = vector.extract_strided_slice %39 {offsets = [0, 14], sizes = [8, 1], strides = [1, 1]} : vector<8x32xf32> to vector<8x1xf32>
    %182 = vector.extract_strided_slice %0 {offsets = [14, 0], sizes = [1, 128], strides = [1, 1]} : vector<32x128xf32> to vector<1x128xf32>
    %183 = vector.broadcast %181 : vector<8x1xf32> to vector<8x128xf32>
    %184 = vector.broadcast %182 : vector<1x128xf32> to vector<8x128xf32>
    %185 = arith.addf %183, %184 : vector<8x128xf32>
    %cst_19 = arith.constant 0.000000e+00 : f32
    %186 = vector.broadcast %cst_19 : f32 to vector<8x128xf32>
    %187 = arith.maximumf %185, %186 : vector<8x128xf32>
    %188 = vector.broadcast %16 : f32 to vector<8x128xf32>
    %189 = arith.mulf %187, %188 : vector<8x128xf32>
    %190 = arith.addf %180, %189 : vector<8x128xf32>
    %191 = vector.extract_strided_slice %39 {offsets = [0, 15], sizes = [8, 1], strides = [1, 1]} : vector<8x32xf32> to vector<8x1xf32>
    %192 = vector.extract_strided_slice %0 {offsets = [15, 0], sizes = [1, 128], strides = [1, 1]} : vector<32x128xf32> to vector<1x128xf32>
    %193 = vector.broadcast %191 : vector<8x1xf32> to vector<8x128xf32>
    %194 = vector.broadcast %192 : vector<1x128xf32> to vector<8x128xf32>
    %195 = arith.addf %193, %194 : vector<8x128xf32>
    %cst_20 = arith.constant 0.000000e+00 : f32
    %196 = vector.broadcast %cst_20 : f32 to vector<8x128xf32>
    %197 = arith.maximumf %195, %196 : vector<8x128xf32>
    %198 = vector.broadcast %17 : f32 to vector<8x128xf32>
    %199 = arith.mulf %197, %198 : vector<8x128xf32>
    %200 = arith.addf %190, %199 : vector<8x128xf32>
    %201 = vector.extract_strided_slice %39 {offsets = [0, 16], sizes = [8, 1], strides = [1, 1]} : vector<8x32xf32> to vector<8x1xf32>
    %202 = vector.extract_strided_slice %0 {offsets = [16, 0], sizes = [1, 128], strides = [1, 1]} : vector<32x128xf32> to vector<1x128xf32>
    %203 = vector.broadcast %201 : vector<8x1xf32> to vector<8x128xf32>
    %204 = vector.broadcast %202 : vector<1x128xf32> to vector<8x128xf32>
    %205 = arith.addf %203, %204 : vector<8x128xf32>
    %cst_21 = arith.constant 0.000000e+00 : f32
    %206 = vector.broadcast %cst_21 : f32 to vector<8x128xf32>
    %207 = arith.maximumf %205, %206 : vector<8x128xf32>
    %208 = vector.broadcast %18 : f32 to vector<8x128xf32>
    %209 = arith.mulf %207, %208 : vector<8x128xf32>
    %210 = arith.addf %200, %209 : vector<8x128xf32>
    %211 = vector.extract_strided_slice %39 {offsets = [0, 17], sizes = [8, 1], strides = [1, 1]} : vector<8x32xf32> to vector<8x1xf32>
    %212 = vector.extract_strided_slice %0 {offsets = [17, 0], sizes = [1, 128], strides = [1, 1]} : vector<32x128xf32> to vector<1x128xf32>
    %213 = vector.broadcast %211 : vector<8x1xf32> to vector<8x128xf32>
    %214 = vector.broadcast %212 : vector<1x128xf32> to vector<8x128xf32>
    %215 = arith.addf %213, %214 : vector<8x128xf32>
    %cst_22 = arith.constant 0.000000e+00 : f32
    %216 = vector.broadcast %cst_22 : f32 to vector<8x128xf32>
    %217 = arith.maximumf %215, %216 : vector<8x128xf32>
    %218 = vector.broadcast %19 : f32 to vector<8x128xf32>
    %219 = arith.mulf %217, %218 : vector<8x128xf32>
    %220 = arith.addf %210, %219 : vector<8x128xf32>
    %221 = vector.extract_strided_slice %39 {offsets = [0, 18], sizes = [8, 1], strides = [1, 1]} : vector<8x32xf32> to vector<8x1xf32>
    %222 = vector.extract_strided_slice %0 {offsets = [18, 0], sizes = [1, 128], strides = [1, 1]} : vector<32x128xf32> to vector<1x128xf32>
    %223 = vector.broadcast %221 : vector<8x1xf32> to vector<8x128xf32>
    %224 = vector.broadcast %222 : vector<1x128xf32> to vector<8x128xf32>
    %225 = arith.addf %223, %224 : vector<8x128xf32>
    %cst_23 = arith.constant 0.000000e+00 : f32
    %226 = vector.broadcast %cst_23 : f32 to vector<8x128xf32>
    %227 = arith.maximumf %225, %226 : vector<8x128xf32>
    %228 = vector.broadcast %20 : f32 to vector<8x128xf32>
    %229 = arith.mulf %227, %228 : vector<8x128xf32>
    %230 = arith.addf %220, %229 : vector<8x128xf32>
    %231 = vector.extract_strided_slice %39 {offsets = [0, 19], sizes = [8, 1], strides = [1, 1]} : vector<8x32xf32> to vector<8x1xf32>
    %232 = vector.extract_strided_slice %0 {offsets = [19, 0], sizes = [1, 128], strides = [1, 1]} : vector<32x128xf32> to vector<1x128xf32>
    %233 = vector.broadcast %231 : vector<8x1xf32> to vector<8x128xf32>
    %234 = vector.broadcast %232 : vector<1x128xf32> to vector<8x128xf32>
    %235 = arith.addf %233, %234 : vector<8x128xf32>
    %cst_24 = arith.constant 0.000000e+00 : f32
    %236 = vector.broadcast %cst_24 : f32 to vector<8x128xf32>
    %237 = arith.maximumf %235, %236 : vector<8x128xf32>
    %238 = vector.broadcast %21 : f32 to vector<8x128xf32>
    %239 = arith.mulf %237, %238 : vector<8x128xf32>
    %240 = arith.addf %230, %239 : vector<8x128xf32>
    %241 = vector.extract_strided_slice %39 {offsets = [0, 20], sizes = [8, 1], strides = [1, 1]} : vector<8x32xf32> to vector<8x1xf32>
    %242 = vector.extract_strided_slice %0 {offsets = [20, 0], sizes = [1, 128], strides = [1, 1]} : vector<32x128xf32> to vector<1x128xf32>
    %243 = vector.broadcast %241 : vector<8x1xf32> to vector<8x128xf32>
    %244 = vector.broadcast %242 : vector<1x128xf32> to vector<8x128xf32>
    %245 = arith.addf %243, %244 : vector<8x128xf32>
    %cst_25 = arith.constant 0.000000e+00 : f32
    %246 = vector.broadcast %cst_25 : f32 to vector<8x128xf32>
    %247 = arith.maximumf %245, %246 : vector<8x128xf32>
    %248 = vector.broadcast %22 : f32 to vector<8x128xf32>
    %249 = arith.mulf %247, %248 : vector<8x128xf32>
    %250 = arith.addf %240, %249 : vector<8x128xf32>
    %251 = vector.extract_strided_slice %39 {offsets = [0, 21], sizes = [8, 1], strides = [1, 1]} : vector<8x32xf32> to vector<8x1xf32>
    %252 = vector.extract_strided_slice %0 {offsets = [21, 0], sizes = [1, 128], strides = [1, 1]} : vector<32x128xf32> to vector<1x128xf32>
    %253 = vector.broadcast %251 : vector<8x1xf32> to vector<8x128xf32>
    %254 = vector.broadcast %252 : vector<1x128xf32> to vector<8x128xf32>
    %255 = arith.addf %253, %254 : vector<8x128xf32>
    %cst_26 = arith.constant 0.000000e+00 : f32
    %256 = vector.broadcast %cst_26 : f32 to vector<8x128xf32>
    %257 = arith.maximumf %255, %256 : vector<8x128xf32>
    %258 = vector.broadcast %23 : f32 to vector<8x128xf32>
    %259 = arith.mulf %257, %258 : vector<8x128xf32>
    %260 = arith.addf %250, %259 : vector<8x128xf32>
    %261 = vector.extract_strided_slice %39 {offsets = [0, 22], sizes = [8, 1], strides = [1, 1]} : vector<8x32xf32> to vector<8x1xf32>
    %262 = vector.extract_strided_slice %0 {offsets = [22, 0], sizes = [1, 128], strides = [1, 1]} : vector<32x128xf32> to vector<1x128xf32>
    %263 = vector.broadcast %261 : vector<8x1xf32> to vector<8x128xf32>
    %264 = vector.broadcast %262 : vector<1x128xf32> to vector<8x128xf32>
    %265 = arith.addf %263, %264 : vector<8x128xf32>
    %cst_27 = arith.constant 0.000000e+00 : f32
    %266 = vector.broadcast %cst_27 : f32 to vector<8x128xf32>
    %267 = arith.maximumf %265, %266 : vector<8x128xf32>
    %268 = vector.broadcast %24 : f32 to vector<8x128xf32>
    %269 = arith.mulf %267, %268 : vector<8x128xf32>
    %270 = arith.addf %260, %269 : vector<8x128xf32>
    %271 = vector.extract_strided_slice %39 {offsets = [0, 23], sizes = [8, 1], strides = [1, 1]} : vector<8x32xf32> to vector<8x1xf32>
    %272 = vector.extract_strided_slice %0 {offsets = [23, 0], sizes = [1, 128], strides = [1, 1]} : vector<32x128xf32> to vector<1x128xf32>
    %273 = vector.broadcast %271 : vector<8x1xf32> to vector<8x128xf32>
    %274 = vector.broadcast %272 : vector<1x128xf32> to vector<8x128xf32>
    %275 = arith.addf %273, %274 : vector<8x128xf32>
    %cst_28 = arith.constant 0.000000e+00 : f32
    %276 = vector.broadcast %cst_28 : f32 to vector<8x128xf32>
    %277 = arith.maximumf %275, %276 : vector<8x128xf32>
    %278 = vector.broadcast %25 : f32 to vector<8x128xf32>
    %279 = arith.mulf %277, %278 : vector<8x128xf32>
    %280 = arith.addf %270, %279 : vector<8x128xf32>
    %281 = vector.extract_strided_slice %39 {offsets = [0, 24], sizes = [8, 1], strides = [1, 1]} : vector<8x32xf32> to vector<8x1xf32>
    %282 = vector.extract_strided_slice %0 {offsets = [24, 0], sizes = [1, 128], strides = [1, 1]} : vector<32x128xf32> to vector<1x128xf32>
    %283 = vector.broadcast %281 : vector<8x1xf32> to vector<8x128xf32>
    %284 = vector.broadcast %282 : vector<1x128xf32> to vector<8x128xf32>
    %285 = arith.addf %283, %284 : vector<8x128xf32>
    %cst_29 = arith.constant 0.000000e+00 : f32
    %286 = vector.broadcast %cst_29 : f32 to vector<8x128xf32>
    %287 = arith.maximumf %285, %286 : vector<8x128xf32>
    %288 = vector.broadcast %26 : f32 to vector<8x128xf32>
    %289 = arith.mulf %287, %288 : vector<8x128xf32>
    %290 = arith.addf %280, %289 : vector<8x128xf32>
    %291 = vector.extract_strided_slice %39 {offsets = [0, 25], sizes = [8, 1], strides = [1, 1]} : vector<8x32xf32> to vector<8x1xf32>
    %292 = vector.extract_strided_slice %0 {offsets = [25, 0], sizes = [1, 128], strides = [1, 1]} : vector<32x128xf32> to vector<1x128xf32>
    %293 = vector.broadcast %291 : vector<8x1xf32> to vector<8x128xf32>
    %294 = vector.broadcast %292 : vector<1x128xf32> to vector<8x128xf32>
    %295 = arith.addf %293, %294 : vector<8x128xf32>
    %cst_30 = arith.constant 0.000000e+00 : f32
    %296 = vector.broadcast %cst_30 : f32 to vector<8x128xf32>
    %297 = arith.maximumf %295, %296 : vector<8x128xf32>
    %298 = vector.broadcast %27 : f32 to vector<8x128xf32>
    %299 = arith.mulf %297, %298 : vector<8x128xf32>
    %300 = arith.addf %290, %299 : vector<8x128xf32>
    %301 = vector.extract_strided_slice %39 {offsets = [0, 26], sizes = [8, 1], strides = [1, 1]} : vector<8x32xf32> to vector<8x1xf32>
    %302 = vector.extract_strided_slice %0 {offsets = [26, 0], sizes = [1, 128], strides = [1, 1]} : vector<32x128xf32> to vector<1x128xf32>
    %303 = vector.broadcast %301 : vector<8x1xf32> to vector<8x128xf32>
    %304 = vector.broadcast %302 : vector<1x128xf32> to vector<8x128xf32>
    %305 = arith.addf %303, %304 : vector<8x128xf32>
    %cst_31 = arith.constant 0.000000e+00 : f32
    %306 = vector.broadcast %cst_31 : f32 to vector<8x128xf32>
    %307 = arith.maximumf %305, %306 : vector<8x128xf32>
    %308 = vector.broadcast %28 : f32 to vector<8x128xf32>
    %309 = arith.mulf %307, %308 : vector<8x128xf32>
    %310 = arith.addf %300, %309 : vector<8x128xf32>
    %311 = vector.extract_strided_slice %39 {offsets = [0, 27], sizes = [8, 1], strides = [1, 1]} : vector<8x32xf32> to vector<8x1xf32>
    %312 = vector.extract_strided_slice %0 {offsets = [27, 0], sizes = [1, 128], strides = [1, 1]} : vector<32x128xf32> to vector<1x128xf32>
    %313 = vector.broadcast %311 : vector<8x1xf32> to vector<8x128xf32>
    %314 = vector.broadcast %312 : vector<1x128xf32> to vector<8x128xf32>
    %315 = arith.addf %313, %314 : vector<8x128xf32>
    %cst_32 = arith.constant 0.000000e+00 : f32
    %316 = vector.broadcast %cst_32 : f32 to vector<8x128xf32>
    %317 = arith.maximumf %315, %316 : vector<8x128xf32>
    %318 = vector.broadcast %29 : f32 to vector<8x128xf32>
    %319 = arith.mulf %317, %318 : vector<8x128xf32>
    %320 = arith.addf %310, %319 : vector<8x128xf32>
    %321 = vector.extract_strided_slice %39 {offsets = [0, 28], sizes = [8, 1], strides = [1, 1]} : vector<8x32xf32> to vector<8x1xf32>
    %322 = vector.extract_strided_slice %0 {offsets = [28, 0], sizes = [1, 128], strides = [1, 1]} : vector<32x128xf32> to vector<1x128xf32>
    %323 = vector.broadcast %321 : vector<8x1xf32> to vector<8x128xf32>
    %324 = vector.broadcast %322 : vector<1x128xf32> to vector<8x128xf32>
    %325 = arith.addf %323, %324 : vector<8x128xf32>
    %cst_33 = arith.constant 0.000000e+00 : f32
    %326 = vector.broadcast %cst_33 : f32 to vector<8x128xf32>
    %327 = arith.maximumf %325, %326 : vector<8x128xf32>
    %328 = vector.broadcast %30 : f32 to vector<8x128xf32>
    %329 = arith.mulf %327, %328 : vector<8x128xf32>
    %330 = arith.addf %320, %329 : vector<8x128xf32>
    %331 = vector.extract_strided_slice %39 {offsets = [0, 29], sizes = [8, 1], strides = [1, 1]} : vector<8x32xf32> to vector<8x1xf32>
    %332 = vector.extract_strided_slice %0 {offsets = [29, 0], sizes = [1, 128], strides = [1, 1]} : vector<32x128xf32> to vector<1x128xf32>
    %333 = vector.broadcast %331 : vector<8x1xf32> to vector<8x128xf32>
    %334 = vector.broadcast %332 : vector<1x128xf32> to vector<8x128xf32>
    %335 = arith.addf %333, %334 : vector<8x128xf32>
    %cst_34 = arith.constant 0.000000e+00 : f32
    %336 = vector.broadcast %cst_34 : f32 to vector<8x128xf32>
    %337 = arith.maximumf %335, %336 : vector<8x128xf32>
    %338 = vector.broadcast %31 : f32 to vector<8x128xf32>
    %339 = arith.mulf %337, %338 : vector<8x128xf32>
    %340 = arith.addf %330, %339 : vector<8x128xf32>
    %341 = vector.extract_strided_slice %39 {offsets = [0, 30], sizes = [8, 1], strides = [1, 1]} : vector<8x32xf32> to vector<8x1xf32>
    %342 = vector.extract_strided_slice %0 {offsets = [30, 0], sizes = [1, 128], strides = [1, 1]} : vector<32x128xf32> to vector<1x128xf32>
    %343 = vector.broadcast %341 : vector<8x1xf32> to vector<8x128xf32>
    %344 = vector.broadcast %342 : vector<1x128xf32> to vector<8x128xf32>
    %345 = arith.addf %343, %344 : vector<8x128xf32>
    %cst_35 = arith.constant 0.000000e+00 : f32
    %346 = vector.broadcast %cst_35 : f32 to vector<8x128xf32>
    %347 = arith.maximumf %345, %346 : vector<8x128xf32>
    %348 = vector.broadcast %32 : f32 to vector<8x128xf32>
    %349 = arith.mulf %347, %348 : vector<8x128xf32>
    %350 = arith.addf %340, %349 : vector<8x128xf32>
    %351 = vector.extract_strided_slice %39 {offsets = [0, 31], sizes = [8, 1], strides = [1, 1]} : vector<8x32xf32> to vector<8x1xf32>
    %352 = vector.extract_strided_slice %0 {offsets = [31, 0], sizes = [1, 128], strides = [1, 1]} : vector<32x128xf32> to vector<1x128xf32>
    %353 = vector.broadcast %351 : vector<8x1xf32> to vector<8x128xf32>
    %354 = vector.broadcast %352 : vector<1x128xf32> to vector<8x128xf32>
    %355 = arith.addf %353, %354 : vector<8x128xf32>
    %cst_36 = arith.constant 0.000000e+00 : f32
    %356 = vector.broadcast %cst_36 : f32 to vector<8x128xf32>
    %357 = arith.maximumf %355, %356 : vector<8x128xf32>
    %358 = vector.broadcast %33 : f32 to vector<8x128xf32>
    %359 = arith.mulf %357, %358 : vector<8x128xf32>
    %360 = arith.addf %350, %359 : vector<8x128xf32>
    %361 = vector.broadcast %1 : f32 to vector<8x128xf32>
    %362 = arith.addf %360, %361 : vector<8x128xf32>
    %363 = arith.index_cast %37 : i32 to index
    %c0_37 = arith.constant 0 : index
    %364 = vector.load %arg6[%363, %c0_37] : memref<8x128xf32, #tpu.memory_space<vmem>>, vector<8x128xf32>
    tpu.vector_store %arg6[%363, %c0_37], %362 {strides = array<i32>} : memref<8x128xf32, #tpu.memory_space<vmem>>, vector<8x128xf32>,
    %c1_i32_38 = arith.constant 1 : i32
    return
  }
  func.func @transform_0(%arg0: i32, %arg1: i32) -> (i32, i32) {
    %c0_i32 = arith.constant 0 : i32
    %c0_i32_0 = arith.constant 0 : i32
    return %c0_i32, %arg0 : i32, i32
  }
  func.func @transform_1(%arg0: i32, %arg1: i32) -> (i32, i32) {
    %c0_i32 = arith.constant 0 : i32
    %c0_i32_0 = arith.constant 0 : i32
    return %arg1, %c0_i32 : i32, i32
  }
  func.func @transform_2(%arg0: i32, %arg1: i32) -> i32 {
    %c0_i32 = arith.constant 0 : i32
    %c0_i32_0 = arith.constant 0 : i32
    return %c0_i32 : i32
  }
  func.func @transform_3(%arg0: i32, %arg1: i32) -> i32 {
    %c0_i32 = arith.constant 0 : i32
    %c0_i32_0 = arith.constant 0 : i32
    return %c0_i32 : i32
  }
  func.func @transform_4(%arg0: i32, %arg1: i32) -> (i32, i32) {
    %c0_i32 = arith.constant 0 : i32
    return %arg1, %arg0 : i32, i32
  }
}

</mosaic_0001>

<llo_original>
// kernel: tpu_custom_call.1
$region0: #{tpu_custom_call.1}
  #allocation0 [shape = 'u32[]', space=smem, size = 0x4, offset = 0x4, fixed_abs, tag = 'smem constant byte address 0x4 - core index']
  #allocation1 [shape = 'u32[72,128]{1,0:T(1,128)}', space=vmem, size = 0x9000, scoped, tag = 'internal scratch']
  #allocation2 [shape = 'f32[1]{0:T(128)S(6)}', space=smem, size = 0x200, scoped, tag = 'scoped memory for tpu_custom_call.1']
  %s0 = inlined_call_operand.hbm [shape: f32[32,128], index: 0, kind: input, shape index: {}]
  %s1 = inlined_call_operand.hbm [shape: f32[8,32], index: 1, kind: input, shape index: {}]
  %s2 = inlined_call_operand.vmem [shape: f32[32], index: 2, kind: input, shape index: {}]
  %s3 = inlined_call_operand.<no memory space> [shape: f32[1], index: 3, kind: input, shape index: {}]
  %s4 = inlined_call_operand.hbm [shape: f32[8,128], index: 4, kind: output, shape index: {}]
  %s5 = sld [smem:[#allocation0]]
  $region38: #{tpu_custom_call.1} parent=0
    _
  %s7 = ssub.s32 1, %s5
  %s8 = scalar_select 0, %s7, %s5
  %9 = sst [smem:[#allocation2]] %s3
  $region1: #{tpu_custom_call.1} parent=0
    #allocation3 [shape = 'u8[16384]{0}', space=vmem, size = 0x4000, scoped, tag = 'input window, operand 0, single buffered']
    #allocation4 [shape = 's32[1]{0}', space=sflag, size = 0x4, scoped, tag = 'scoped memory for tpu_custom_call.1']
    #allocation5 [shape = 's32[1]{0}', space=sflag, size = 0x4, scoped, tag = 'scoped memory for tpu_custom_call.1']
    #allocation6 [shape = 's32[1]{0}', space=sflag, size = 0x4, scoped, tag = 'scoped memory for tpu_custom_call.1']
    #allocation7 [shape = 'u8[4096]{0}', space=vmem, size = 0x1000, scoped, tag = 'input window, operand 1, single buffered']
    #allocation8 [shape = 's32[1]{0}', space=sflag, size = 0x4, scoped, tag = 'scoped memory for tpu_custom_call.1']
    #allocation9 [shape = 'u8[512]{0}', space=smem, size = 0x200, scoped, tag = 'input window, operand 2, single buffered']
    #allocation10 [shape = 'u8[4096]{0}', space=vmem, size = 0x1000, scoped, tag = 'output window, operand 0, single buffered']
    %10 = vsyncpa [#allocation4], 0
    %11 = vsyncpa [#allocation8], 0
    %12 = vsyncpa [#allocation6], 0
    %13 = vsyncpa [#allocation5], 0
    // Predicated region
    $region2: #{tpu_custom_call.1} parent=1 // pred_check
      _
    $region3: #{tpu_custom_call.1} parent=1 // pred_check_branch
      %15 = sbr.rel (0) target = $region5
    $region4: #{tpu_custom_call.1} parent=1 // pred_region
      %17 = vsyncadd [#allocation4], 0
      %s18 = sshll.u32 %s0, 4
      %s19 = int_to_ptr.hbm [resolvable:$true] %s18
      %s20 = sshll.u32 [#allocation3], 4
      %s21 = int_to_ptr.vmem [resolvable:$true] %s20
      %26 = dma.hbm_to_vmem [thread:$0]  %s19, 512, %s21, [#allocation4], 128, 128, 8
    $region5: #{tpu_custom_call.1} parent=1 // pred_fallthru
      _
    // Predicated region
    $region6: #{tpu_custom_call.1} parent=1 // pred_check
      _
    $region7: #{tpu_custom_call.1} parent=1 // pred_check_branch
      %28 = sbr.rel (0) target = $region9
    $region8: #{tpu_custom_call.1} parent=1 // pred_region
      %30 = vsyncadd [#allocation8], 0
      %s32 = sshll.u32 %s1, 4
      %s33 = int_to_ptr.hbm [resolvable:$true] %s32
      %s34 = sshll.u32 [#allocation7], 4
      %s35 = int_to_ptr.vmem [resolvable:$true] %s34
      %37 = dma.hbm_to_vmem [thread:$0]  %s33, 128, %s35, [#allocation8]
    $region9: #{tpu_custom_call.1} parent=1 // pred_fallthru
      _
    // Predicated region
    $region10: #{tpu_custom_call.1} parent=1 // pred_check
      _
    $region11: #{tpu_custom_call.1} parent=1 // pred_check_branch
      %39 = sbr.rel (0) target = $region13
    $region12: #{tpu_custom_call.1} parent=1 // pred_region
      %41 = vsyncadd [#allocation6], 0
      %s43 = sshll.u32 %s2, 4
      %s44 = int_to_ptr.vmem [resolvable:$true] %s43
      %46 = dma.vmem_to_smem %s44, 16, [#allocation9], [#allocation6]
    $region13: #{tpu_custom_call.1} parent=1 // pred_fallthru
      _
    // Predicated region
    $region14: #{tpu_custom_call.1} parent=1 // pred_check
      _
    $region15: #{tpu_custom_call.1} parent=1 // pred_check_branch
      %48 = sbr.rel (0) target = $region17
    $region16: #{tpu_custom_call.1} parent=1 // pred_region
      _
    $region17: #{tpu_custom_call.1} parent=1 // pred_fallthru
      _
    // Predicated region
    $region18: #{tpu_custom_call.1} parent=1 // pred_check
      _
    $region19: #{tpu_custom_call.1} parent=1 // pred_check_branch
      %50 = sbr.rel (0) target = $region21
    $region20: #{tpu_custom_call.1} parent=1 // pred_region
      %52 = dma.done [#allocation4], 512
    $region21: #{tpu_custom_call.1} parent=1 // pred_fallthru
      _
    // Predicated region
    $region22: #{tpu_custom_call.1} parent=1 // pred_check
      _
    $region23: #{tpu_custom_call.1} parent=1 // pred_check_branch
      %54 = sbr.rel (0) target = $region25
    $region24: #{tpu_custom_call.1} parent=1 // pred_region
      %56 = dma.done [#allocation8], 128
    $region25: #{tpu_custom_call.1} parent=1 // pred_fallthru
      _
    // Predicated region
    $region26: #{tpu_custom_call.1} parent=1 // pred_check
      _
    $region27: #{tpu_custom_call.1} parent=1 // pred_check_branch
      %58 = sbr.rel (0) target = $region29
    $region28: #{tpu_custom_call.1} parent=1 // pred_region
      %60 = dma.done [#allocation6], 16
    $region29: #{tpu_custom_call.1} parent=1 // pred_fallthru
      _
    %61 = sfence
    %v62 = vld [vmem:[#allocation3] sm:$0xff]
    %v63 = vld [vmem:[#allocation3 + $0x8] sm:$0xff]
    %v64 = vld [vmem:[#allocation3 + $0x10] sm:$0xff]
    %v65 = vld [vmem:[#allocation3 + $0x18] sm:$0xff]
    %s66 = sld [smem:[#allocation2]]
    %s67 = sld [smem:[#allocation9]]
    %s68 = sld [smem:[#allocation9 + $0x1]]
    %s69 = sld [smem:[#allocation9 + $0x2]]
    %s70 = sld [smem:[#allocation9 + $0x3]]
    %s71 = sld [smem:[#allocation9 + $0x4]]
    %s72 = sld [smem:[#allocation9 + $0x5]]
    %s73 = sld [smem:[#allocation9 + $0x6]]
    %s74 = sld [smem:[#allocation9 + $0x7]]
    %s75 = sld [smem:[#allocation9 + $0x8]]
    %s76 = sld [smem:[#allocation9 + $0x9]]
    %s77 = sld [smem:[#allocation9 + $0xa]]
    %s78 = sld [smem:[#allocation9 + $0xb]]
    %s79 = sld [smem:[#allocation9 + $0xc]]
    %s80 = sld [smem:[#allocation9 + $0xd]]
    %s81 = sld [smem:[#allocation9 + $0xe]]
    %s82 = sld [smem:[#allocation9 + $0xf]]
    %s83 = sld [smem:[#allocation9 + $0x10]]
    %s84 = sld [smem:[#allocation9 + $0x11]]
    %s85 = sld [smem:[#allocation9 + $0x12]]
    %s86 = sld [smem:[#allocation9 + $0x13]]
    %s87 = sld [smem:[#allocation9 + $0x14]]
    %s88 = sld [smem:[#allocation9 + $0x15]]
    %s89 = sld [smem:[#allocation9 + $0x16]]
    %s90 = sld [smem:[#allocation9 + $0x17]]
    %s91 = sld [smem:[#allocation9 + $0x18]]
    %s92 = sld [smem:[#allocation9 + $0x19]]
    %s93 = sld [smem:[#allocation9 + $0x1a]]
    %s94 = sld [smem:[#allocation9 + $0x1b]]
    %s95 = sld [smem:[#allocation9 + $0x1c]]
    %s96 = sld [smem:[#allocation9 + $0x1d]]
    %s97 = sld [smem:[#allocation9 + $0x1e]]
    %s98 = sld [smem:[#allocation9 + $0x1f]]
    %v99 = vld [vmem:[#allocation7] sm:$0xff]
    %101 = vset.pattern.permute.xlu0 0
    %102 = vperm.xlu0 %101, %v99
    %v103 = vpop.permute.xlu0 %102
    %v105 = vperm.slane %v62, 0
    %v106 = vadd.f32 %v103, %v105
    %v107 = vmax.f32 %v106, 0.0
    %v108 = vstv %s67
    %v109 = vmul.f32 %v107, %v108
    %v110 = vadd.f32 %v109, 0.0
    %111 = vset.pattern.permute.xlu0 1
    %112 = vperm.xlu0 %111, %v99
    %v113 = vpop.permute.xlu0 %112
    %v115 = vperm.slane %v62, 1
    %v116 = vadd.f32 %v113, %v115
    %v117 = vmax.f32 %v116, 0.0
    %v118 = vstv %s68
    %v119 = vmul.f32 %v117, %v118
    %v120 = vadd.f32 %v110, %v119
    %121 = vset.pattern.permute.xlu0 2
    %122 = vperm.xlu0 %121, %v99
    %v123 = vpop.permute.xlu0 %122
    %v125 = vperm.slane %v62, 2
    %v126 = vadd.f32 %v123, %v125
    %v127 = vmax.f32 %v126, 0.0
    %v128 = vstv %s69
    %v129 = vmul.f32 %v127, %v128
    %v130 = vadd.f32 %v120, %v129
    %131 = vset.pattern.permute.xlu0 3
    %132 = vperm.xlu0 %131, %v99
    %v133 = vpop.permute.xlu0 %132
    %v135 = vperm.slane %v62, 3
    %v136 = vadd.f32 %v133, %v135
    %v137 = vmax.f32 %v136, 0.0
    %v138 = vstv %s70
    %v139 = vmul.f32 %v137, %v138
    %v140 = vadd.f32 %v130, %v139
    %141 = vset.pattern.permute.xlu0 4
    %142 = vperm.xlu0 %141, %v99
    %v143 = vpop.permute.xlu0 %142
    %v145 = vperm.slane %v62, 4
    %v146 = vadd.f32 %v143, %v145
    %v147 = vmax.f32 %v146, 0.0
    %v148 = vstv %s71
    %v149 = vmul.f32 %v147, %v148
    %v150 = vadd.f32 %v140, %v149
    %151 = vset.pattern.permute.xlu0 5
    %152 = vperm.xlu0 %151, %v99
    %v153 = vpop.permute.xlu0 %152
    %v155 = vperm.slane %v62, 5
    %v156 = vadd.f32 %v153, %v155
    %v157 = vmax.f32 %v156, 0.0
    %v158 = vstv %s72
    %v159 = vmul.f32 %v157, %v158
    %v160 = vadd.f32 %v150, %v159
    %161 = vset.pattern.permute.xlu0 6
    %162 = vperm.xlu0 %161, %v99
    %v163 = vpop.permute.xlu0 %162
    %v165 = vperm.slane %v62, 6
    %v166 = vadd.f32 %v163, %v165
    %v167 = vmax.f32 %v166, 0.0
    %v168 = vstv %s73
    %v169 = vmul.f32 %v167, %v168
    %v170 = vadd.f32 %v160, %v169
    %171 = vset.pattern.permute.xlu0 7
    %172 = vperm.xlu0 %171, %v99
    %v173 = vpop.permute.xlu0 %172
    %v175 = vperm.slane %v62, 7
    %v176 = vadd.f32 %v173, %v175
    %v177 = vmax.f32 %v176, 0.0
    %v178 = vstv %s74
    %v179 = vmul.f32 %v177, %v178
    %v180 = vadd.f32 %v170, %v179
    %181 = vset.pattern.permute.xlu0 8
    %182 = vperm.xlu0 %181, %v99
    %v183 = vpop.permute.xlu0 %182
    %v185 = vperm.slane %v63, 0
    %v186 = vadd.f32 %v183, %v185
    %v187 = vmax.f32 %v186, 0.0
    %v188 = vstv %s75
    %v189 = vmul.f32 %v187, %v188
    %v190 = vadd.f32 %v180, %v189
    %191 = vset.pattern.permute.xlu0 9
    %192 = vperm.xlu0 %191, %v99
    %v193 = vpop.permute.xlu0 %192
    %v195 = vperm.slane %v63, 1
    %v196 = vadd.f32 %v193, %v195
    %v197 = vmax.f32 %v196, 0.0
    %v198 = vstv %s76
    %v199 = vmul.f32 %v197, %v198
    %v200 = vadd.f32 %v190, %v199
    %201 = vset.pattern.permute.xlu0 10
    %202 = vperm.xlu0 %201, %v99
    %v203 = vpop.permute.xlu0 %202
    %v205 = vperm.slane %v63, 2
    %v206 = vadd.f32 %v203, %v205
    %v207 = vmax.f32 %v206, 0.0
    %v208 = vstv %s77
    %v209 = vmul.f32 %v207, %v208
    %v210 = vadd.f32 %v200, %v209
    %211 = vset.pattern.permute.xlu0 11
    %212 = vperm.xlu0 %211, %v99
    %v213 = vpop.permute.xlu0 %212
    %v215 = vperm.slane %v63, 3
    %v216 = vadd.f32 %v213, %v215
    %v217 = vmax.f32 %v216, 0.0
    %v218 = vstv %s78
    %v219 = vmul.f32 %v217, %v218
    %v220 = vadd.f32 %v210, %v219
    %221 = vset.pattern.permute.xlu0 12
    %222 = vperm.xlu0 %221, %v99
    %v223 = vpop.permute.xlu0 %222
    %v225 = vperm.slane %v63, 4
    %v226 = vadd.f32 %v223, %v225
    %v227 = vmax.f32 %v226, 0.0
    %v228 = vstv %s79
    %v229 = vmul.f32 %v227, %v228
    %v230 = vadd.f32 %v220, %v229
    %231 = vset.pattern.permute.xlu0 13
    %232 = vperm.xlu0 %231, %v99
    %v233 = vpop.permute.xlu0 %232
    %v235 = vperm.slane %v63, 5
    %v236 = vadd.f32 %v233, %v235
    %v237 = vmax.f32 %v236, 0.0
    %v238 = vstv %s80
    %v239 = vmul.f32 %v237, %v238
    %v240 = vadd.f32 %v230, %v239
    %241 = vset.pattern.permute.xlu0 14
    %242 = vperm.xlu0 %241, %v99
    %v243 = vpop.permute.xlu0 %242
    %v245 = vperm.slane %v63, 6
    %v246 = vadd.f32 %v243, %v245
    %v247 = vmax.f32 %v246, 0.0
    %v248 = vstv %s81
    %v249 = vmul.f32 %v247, %v248
    %v250 = vadd.f32 %v240, %v249
    %251 = vset.pattern.permute.xlu0 15
    %252 = vperm.xlu0 %251, %v99
    %v253 = vpop.permute.xlu0 %252
    %v255 = vperm.slane %v63, 7
    %v256 = vadd.f32 %v253, %v255
    %v257 = vmax.f32 %v256, 0.0
    %v258 = vstv %s82
    %v259 = vmul.f32 %v257, %v258
    %v260 = vadd.f32 %v250, %v259
    %261 = vset.pattern.permute.xlu0 16
    %262 = vperm.xlu0 %261, %v99
    %v263 = vpop.permute.xlu0 %262
    %v265 = vperm.slane %v64, 0
    %v266 = vadd.f32 %v263, %v265
    %v267 = vmax.f32 %v266, 0.0
    %v268 = vstv %s83
    %v269 = vmul.f32 %v267, %v268
    %v270 = vadd.f32 %v260, %v269
    %271 = vset.pattern.permute.xlu0 17
    %272 = vperm.xlu0 %271, %v99
    %v273 = vpop.permute.xlu0 %272
    %v275 = vperm.slane %v64, 1
    %v276 = vadd.f32 %v273, %v275
    %v277 = vmax.f32 %v276, 0.0
    %v278 = vstv %s84
    %v279 = vmul.f32 %v277, %v278
    %v280 = vadd.f32 %v270, %v279
    %281 = vset.pattern.permute.xlu0 18
    %282 = vperm.xlu0 %281, %v99
    %v283 = vpop.permute.xlu0 %282
    %v285 = vperm.slane %v64, 2
    %v286 = vadd.f32 %v283, %v285
    %v287 = vmax.f32 %v286, 0.0
    %v288 = vstv %s85
    %v289 = vmul.f32 %v287, %v288
    %v290 = vadd.f32 %v280, %v289
    %291 = vset.pattern.permute.xlu0 19
    %292 = vperm.xlu0 %291, %v99
    %v293 = vpop.permute.xlu0 %292
    %v295 = vperm.slane %v64, 3
    %v296 = vadd.f32 %v293, %v295
    %v297 = vmax.f32 %v296, 0.0
    %v298 = vstv %s86
    %v299 = vmul.f32 %v297, %v298
    %v300 = vadd.f32 %v290, %v299
    %301 = vset.pattern.permute.xlu0 20
    %302 = vperm.xlu0 %301, %v99
    %v303 = vpop.permute.xlu0 %302
    %v305 = vperm.slane %v64, 4
    %v306 = vadd.f32 %v303, %v305
    %v307 = vmax.f32 %v306, 0.0
    %v308 = vstv %s87
    %v309 = vmul.f32 %v307, %v308
    %v310 = vadd.f32 %v300, %v309
    %311 = vset.pattern.permute.xlu0 21
    %312 = vperm.xlu0 %311, %v99
    %v313 = vpop.permute.xlu0 %312
    %v315 = vperm.slane %v64, 5
    %v316 = vadd.f32 %v313, %v315
    %v317 = vmax.f32 %v316, 0.0
    %v318 = vstv %s88
    %v319 = vmul.f32 %v317, %v318
    %v320 = vadd.f32 %v310, %v319
    %321 = vset.pattern.permute.xlu0 22
    %322 = vperm.xlu0 %321, %v99
    %v323 = vpop.permute.xlu0 %322
    %v325 = vperm.slane %v64, 6
    %v326 = vadd.f32 %v323, %v325
    %v327 = vmax.f32 %v326, 0.0
    %v328 = vstv %s89
    %v329 = vmul.f32 %v327, %v328
    %v330 = vadd.f32 %v320, %v329
    %331 = vset.pattern.permute.xlu0 23
    %332 = vperm.xlu0 %331, %v99
    %v333 = vpop.permute.xlu0 %332
    %v335 = vperm.slane %v64, 7
    %v336 = vadd.f32 %v333, %v335
    %v337 = vmax.f32 %v336, 0.0
    %v338 = vstv %s90
    %v339 = vmul.f32 %v337, %v338
    %v340 = vadd.f32 %v330, %v339
    %341 = vset.pattern.permute.xlu0 24
    %342 = vperm.xlu0 %341, %v99
    %v343 = vpop.permute.xlu0 %342
    %v345 = vperm.slane %v65, 0
    %v346 = vadd.f32 %v343, %v345
    %v347 = vmax.f32 %v346, 0.0
    %v348 = vstv %s91
    %v349 = vmul.f32 %v347, %v348
    %v350 = vadd.f32 %v340, %v349
    %351 = vset.pattern.permute.xlu0 25
    %352 = vperm.xlu0 %351, %v99
    %v353 = vpop.permute.xlu0 %352
    %v355 = vperm.slane %v65, 1
    %v356 = vadd.f32 %v353, %v355
    %v357 = vmax.f32 %v356, 0.0
    %v358 = vstv %s92
    %v359 = vmul.f32 %v357, %v358
    %v360 = vadd.f32 %v350, %v359
    %361 = vset.pattern.permute.xlu0 26
    %362 = vperm.xlu0 %361, %v99
    %v363 = vpop.permute.xlu0 %362
    %v365 = vperm.slane %v65, 2
    %v366 = vadd.f32 %v363, %v365
    %v367 = vmax.f32 %v366, 0.0
    %v368 = vstv %s93
    %v369 = vmul.f32 %v367, %v368
    %v370 = vadd.f32 %v360, %v369
    %371 = vset.pattern.permute.xlu0 27
    %372 = vperm.xlu0 %371, %v99
    %v373 = vpop.permute.xlu0 %372
    %v375 = vperm.slane %v65, 3
    %v376 = vadd.f32 %v373, %v375
    %v377 = vmax.f32 %v376, 0.0
    %v378 = vstv %s94
    %v379 = vmul.f32 %v377, %v378
    %v380 = vadd.f32 %v370, %v379
    %381 = vset.pattern.permute.xlu0 28
    %382 = vperm.xlu0 %381, %v99
    %v383 = vpop.permute.xlu0 %382
    %v385 = vperm.slane %v65, 4
    %v386 = vadd.f32 %v383, %v385
    %v387 = vmax.f32 %v386, 0.0
    %v388 = vstv %s95
    %v389 = vmul.f32 %v387, %v388
    %v390 = vadd.f32 %v380, %v389
    %391 = vset.pattern.permute.xlu0 29
    %392 = vperm.xlu0 %391, %v99
    %v393 = vpop.permute.xlu0 %392
    %v395 = vperm.slane %v65, 5
    %v396 = vadd.f32 %v393, %v395
    %v397 = vmax.f32 %v396, 0.0
    %v398 = vstv %s96
    %v399 = vmul.f32 %v397, %v398
    %v400 = vadd.f32 %v390, %v399
    %401 = vset.pattern.permute.xlu0 30
    %402 = vperm.xlu0 %401, %v99
    %v403 = vpop.permute.xlu0 %402
    %v405 = vperm.slane %v65, 6
    %v406 = vadd.f32 %v403, %v405
    %v407 = vmax.f32 %v406, 0.0
    %v408 = vstv %s97
    %v409 = vmul.f32 %v407, %v408
    %v410 = vadd.f32 %v400, %v409
    %411 = vset.pattern.permute.xlu0 31
    %412 = vperm.xlu0 %411, %v99
    %v413 = vpop.permute.xlu0 %412
    %v415 = vperm.slane %v65, 7
    %v416 = vadd.f32 %v413, %v415
    %v417 = vmax.f32 %v416, 0.0
    %v418 = vstv %s98
    %v419 = vmul.f32 %v417, %v418
    %v420 = vadd.f32 %v410, %v419
    %v421 = vstv %s66
    %v422 = vadd.f32 %v420, %v421
    %423 = vst [vmem:[#allocation10] sm:$0xff] %v422
    // Predicated region
    $region30: #{tpu_custom_call.1} parent=1 // pred_check
      _
    $region31: #{tpu_custom_call.1} parent=1 // pred_check_branch
      %425 = sbr.rel (0) target = $region33
    $region32: #{tpu_custom_call.1} parent=1 // pred_region
      %427 = vsyncadd [#allocation5], 0
      %s429 = sshll.u32 [#allocation10], 4
      %s430 = int_to_ptr.vmem [resolvable:$true] %s429
      %s431 = sshll.u32 %s4, 4
      %s432 = int_to_ptr.hbm [resolvable:$true] %s431
      %434 = dma.vmem_to_hbm [thread:$0]  %s430, 128, %s432, [#allocation5]
    $region33: #{tpu_custom_call.1} parent=1 // pred_fallthru
      _
    // Predicated region
    $region34: #{tpu_custom_call.1} parent=1 // pred_check
      _
    $region35: #{tpu_custom_call.1} parent=1 // pred_check_branch
      %436 = sbr.rel (0) target = $region37
    $region36: #{tpu_custom_call.1} parent=1 // pred_region
      %438 = dma.done [#allocation5], 128
    $region37: #{tpu_custom_call.1} parent=1 // pred_fallthru
      _
    %439 = vsyncpa [#allocation4], 1
    %440 = vsyncpa [#allocation8], 1
    %441 = vsyncpa [#allocation5], 1
    %442 = vsyncpa [#allocation6], 1

</llo_original>
